<compile_context>
chip_gen: v7x
topology: tpu7x:2x2x1
jax: 0.10.0
libtpu: 0.0.40
codegen_flags: <defaults>
</compile_context>

<pallas_src>
import jax
import jax.numpy as jnp
from jax.experimental import pallas as pl
from jax.experimental.pallas import tpu as pltpu


def _round_up(n, m):
    return ((n + m - 1) // m) * m


def critic_kernel(x_ref, a_ref,
                  w1_ref, b1_ref,
                  w2h_ref, w2a_ref, b2_ref,
                  w3_ref, b3_ref,
                  o_ref):
    # fc1 + relu: (TB, S) @ (S, H1) on the MXU; bias add + relu in f32 on the VPU.
    h1 = jnp.dot(x_ref[...], w1_ref[...], preferred_element_type=jnp.float32)
    h1 = jnp.maximum(h1 + b1_ref[...], 0.0)

    # fc2 over cat([h1, a], 1) == h1 @ W2_h + a @ W2_a.
    h2 = jnp.dot(h1.astype(w2h_ref.dtype), w2h_ref[...],
                 preferred_element_type=jnp.float32)

    # Action term: K == nb_actions is tiny (e.g. 4). Unroll it as VPU
    # broadcast-FMAs so we don't pay an almost-all-padding MXU push/drain.
    na = w2a_ref.shape[0]
    if na <= 8:
        a_tile = a_ref[...].astype(jnp.float32)        # (TB, NA)
        w2a = w2a_ref[...].astype(jnp.float32)         # (NA, H2)
        for j in range(na):
            h2 = h2 + a_tile[:, j:j + 1] * w2a[j:j + 1, :]
    else:
        h2 = h2 + jnp.dot(a_ref[...].astype(w2a_ref.dtype), w2a_ref[...],
                          preferred_element_type=jnp.float32)

    h2 = jnp.maximum(h2 + b2_ref[...], 0.0)

    # fc3 (out_features == 1): VPU multiply + XLU lane reduction instead of a
    # 1-column MXU matmul; b3 is an SMEM scalar. Store is a (TB, 1) block, so
    # HBM writeback is 4 bytes/row (no broadcast slab).
    w3_row = w3_ref[...].astype(jnp.float32)           # (1, H2)
    o_ref[...] = jnp.sum(h2 * w3_row, axis=-1, keepdims=True) + b3_ref[0, 0]


def critic_forward(x, a, params, *, block_b=2048, use_bf16=True):
    """x: (B, nb_states) f32, a: (B, nb_actions) f32 -> (B, 1) f32."""
    w1, b1, w2h, w2a, b2, w3, b3 = params
    B, nb_states = x.shape
    nb_actions = a.shape[1]
    hidden1 = w1.shape[1]
    hidden2 = w2h.shape[1]

    # fc3 weights as a (1, hidden2) row for the in-kernel reduction; b3 as a
    # (1, 1) SMEM scalar; biases always f32.
    w3_row = w3.reshape(1, hidden2)
    b1 = b1.reshape(1, hidden1).astype(jnp.float32)
    b2 = b2.reshape(1, hidden2).astype(jnp.float32)
    b3_s = b3.reshape(1, 1).astype(jnp.float32)

    # bf16 MXU operands by default (f32 accumulation inside the kernel).
    cdt = jnp.bfloat16 if use_bf16 else jnp.float32
    x = x.astype(cdt)
    a = a.astype(cdt)
    w1 = w1.astype(cdt)
    w2h = w2h.astype(cdt)
    w2a = w2a.astype(cdt)
    w3_row = w3_row.astype(cdt)

    # Batch tiling: TB rows per grid step (multiple of 8).
    TB = _round_up(max(8, min(block_b, _round_up(B, 8))), 8)
    # v7x has 2 TensorCores: once B is large enough, keep the grid >= 2 steps
    # so the "parallel" batch axis can actually be split across cores.
    if B >= 1024:
        TB = min(TB, _round_up((B + 1) // 2, 8))
    B_pad = _round_up(B, TB)
    if B_pad != B:
        x = jnp.pad(x, ((0, B_pad - B), (0, 0)))
        a = jnp.pad(a, ((0, B_pad - B), (0, 0)))
    grid = (B_pad // TB,)

    def batch_spec(feat):
        return pl.BlockSpec((TB, feat), lambda i: (i, 0))

    def resident(arr):
        # Whole-array block with a constant index_map: DMA'd once, stays in VMEM.
        return pl.BlockSpec(arr.shape, lambda i: (0, 0))

    # Scoped-VMEM budget: double-buffered streamed tiles + resident weights
    # (counted twice to be safe) + f32 intermediates, with headroom. Clamped
    # to stay within v7x's 64 MiB physical VMEM.
    isz = jnp.dtype(cdt).itemsize

    def tile_bytes(rows, cols, itemsize):
        return _round_up(max(rows, 1), 8) * _round_up(max(cols, 1), 128) * itemsize

    vmem_est = 0
    vmem_est += 2 * tile_bytes(TB, nb_states, isz)       # x tile (double-buffered)
    vmem_est += 2 * tile_bytes(TB, nb_actions, isz)      # a tile
    vmem_est += 2 * tile_bytes(TB, 1, 4)                 # output tile
    for arr in (w1, w2h, w2a, w3_row):
        vmem_est += 2 * tile_bytes(arr.shape[0], arr.shape[1], arr.dtype.itemsize)
    for arr in (b1, b2):
        vmem_est += 2 * tile_bytes(1, arr.shape[1], 4)
    vmem_est += 2 * tile_bytes(TB, hidden1, 4)           # h1 (+ bf16 cast copy)
    vmem_est += 2 * tile_bytes(TB, hidden2, 4)           # h2
    vmem_limit = int(min(max(vmem_est + (8 << 20), 32 << 20), 48 << 20))

    flops = 2 * B_pad * (nb_states * hidden1
                         + (hidden1 + nb_actions) * hidden2
                         + hidden2)
    bytes_accessed = (
        x.size * x.dtype.itemsize + a.size * a.dtype.itemsize
        + sum(int(p.size) * p.dtype.itemsize
              for p in (w1, b1, w2h, w2a, b2, w3_row, b3_s))
        + B_pad * 4)

    out = pl.pallas_call(
        critic_kernel,
        out_shape=jax.ShapeDtypeStruct((B_pad, 1), jnp.float32),
        grid=grid,
        in_specs=[
            batch_spec(nb_states),                                  # x
            batch_spec(nb_actions),                                 # a
            resident(w1), resident(b1),                             # fc1
            resident(w2h), resident(w2a), resident(b2),             # fc2
            resident(w3_row),                                       # fc3 weight
            pl.BlockSpec(memory_space=pltpu.MemorySpace.SMEM),      # fc3 bias
        ],
        out_specs=pl.BlockSpec((TB, 1), lambda i: (i, 0)),
        compiler_params=pltpu.CompilerParams(
            dimension_semantics=("parallel",),
            vmem_limit_bytes=vmem_limit),
        cost_estimate=pl.CostEstimate(
            flops=flops, transcendentals=0, bytes_accessed=bytes_accessed),
    )(x, a, w1, b1, w2h, w2a, b2, w3_row, b3_s)

    return out[:B]


def init_critic_params(key, nb_states, nb_actions, hidden1, hidden2, init_w=0.003):
    """Deterministic init mirroring the PyTorch module's init_weights.

    PyTorch fanin_init uses v = 1/sqrt(weight.size(0)) = 1/sqrt(out_features)
    for fc1 and fc2; fc3 weight ~ U(-init_w, init_w). Biases keep the default
    nn.Linear init U(-1/sqrt(in_features), 1/sqrt(in_features)).
    """
    ks = jax.random.split(key, 6)

    def uniform(k, shape, bound):
        return jax.random.uniform(k, shape, jnp.float32, -bound, bound)

    # weights stored as (in, out)
    v1 = 1.0 / jnp.sqrt(jnp.float32(hidden1))
    w1 = uniform(ks[0], (nb_states, hidden1), v1)
    b1 = uniform(ks[1], (1, hidden1), 1.0 / jnp.sqrt(jnp.float32(nb_states)))

    v2 = 1.0 / jnp.sqrt(jnp.float32(hidden2))
    w2 = uniform(ks[2], (hidden1 + nb_actions, hidden2), v2)
    w2h, w2a = w2[:hidden1], w2[hidden1:]
    b2 = uniform(ks[3], (1, hidden2),
                 1.0 / jnp.sqrt(jnp.float32(hidden1 + nb_actions)))

    w3 = uniform(ks[4], (hidden2, 1), init_w)
    b3 = uniform(ks[5], (1, 1), 1.0 / jnp.sqrt(jnp.float32(hidden2)))

    return (w1, b1, w2h, w2a, b2, w3, b3)


def critic_ref(x, a, params):
    """Pure-JAX reference for correctness checking."""
    w1, b1, w2h, w2a, b2, w3, b3 = params
    h1 = jnp.maximum(x @ w1 + b1, 0.0)
    h2 = jnp.maximum(
        jnp.concatenate([h1, a], axis=1)
        @ jnp.concatenate([w2h, w2a], axis=0) + b2, 0.0)
    return h2 @ w3 + b3


if __name__ == "__main__":
    B = 2
    nb_states = 16
    nb_actions = 4
    hidden1 = 32
    hidden2 = 32

    key = jax.random.PRNGKey(0)
    kx, ka, kp = jax.random.split(key, 3)
    x = jax.random.normal(kx, (B, nb_states), jnp.float32)
    a = jax.random.normal(ka, (B, nb_actions), jnp.float32)
    params = init_critic_params(kp, nb_states, nb_actions, hidden1, hidden2)

    ref = critic_ref(x, a, params)

    # f32 path: exact (up to reduction order) vs the pure-JAX reference.
    out_f32 = jax.block_until_ready(critic_forward(x, a, params, use_bf16=False))
    assert out_f32.shape == (B, 1), out_f32.shape
    assert jnp.allclose(out_f32, ref, atol=1e-5, rtol=1e-5), (out_f32, ref)

    # Default bf16-operand / f32-accumulation path (MXU fast path): looser tol.
    out_bf16 = jax.block_until_ready(critic_forward(x, a, params))
    assert out_bf16.shape == (B, 1), out_bf16.shape
    assert jnp.allclose(out_bf16, ref, atol=2e-2, rtol=2e-2), (out_bf16, ref)

    print("KERNEL_OK")
</pallas_src>

<mosaic_0001>
module attributes {stable_mosaic.version = 11 : i64} {
  func.func @critic_kernel(%arg0: i32, %arg1: memref<8x16xf32, #tpu.memory_space<vmem>>, %arg2: memref<8x4xf32, #tpu.memory_space<vmem>>, %arg3: memref<16x32xf32, #tpu.memory_space<vmem>>, %arg4: memref<1x32xf32, #tpu.memory_space<vmem>>, %arg5: memref<32x32xf32, #tpu.memory_space<vmem>>, %arg6: memref<4x32xf32, #tpu.memory_space<vmem>>, %arg7: memref<1x32xf32, #tpu.memory_space<vmem>>, %arg8: memref<1x32xf32, #tpu.memory_space<vmem>>, %arg9: memref<1x1xf32, #tpu.memory_space<smem>>, %arg10: memref<8x1xf32, #tpu.memory_space<vmem>>) attributes {dimension_semantics = [#tpu.dimension_semantics<parallel>], iteration_bounds = array<i64: 1>, scalar_prefetch = 0 : i64, scratch_operands = 0 : i64, tpu.core_type = #tpu.core_type<tc>, window_params = [{transform_indices = @transform_0, window_bounds = array<i64: 8, 16>}, {transform_indices = @transform_1, window_bounds = array<i64: 8, 4>}, {pipeline_mode = #tpu.pipeline_mode<synchronous>, transform_indices = @transform_2, window_bounds = array<i64: 16, 32>}, {pipeline_mode = #tpu.pipeline_mode<synchronous>, transform_indices = @transform_3, window_bounds = array<i64: 1, 32>}, {pipeline_mode = #tpu.pipeline_mode<synchronous>, transform_indices = @transform_4, window_bounds = array<i64: 32, 32>}, {pipeline_mode = #tpu.pipeline_mode<synchronous>, transform_indices = @transform_5, window_bounds = array<i64: 4, 32>}, {pipeline_mode = #tpu.pipeline_mode<synchronous>, transform_indices = @transform_6, window_bounds = array<i64: 1, 32>}, {pipeline_mode = #tpu.pipeline_mode<synchronous>, transform_indices = @transform_7, window_bounds = array<i64: 1, 32>}, {transform_indices = @transform_8, window_bounds = array<i64: 1, 1>}, {transform_indices = @transform_9, window_bounds = array<i64: 8, 1>}]} {
    %c0 = arith.constant 0 : index
    %c0_0 = arith.constant 0 : index
    %0 = vector.load %arg1[%c0, %c0_0] : memref<8x16xf32, #tpu.memory_space<vmem>>, vector<8x16xf32>
    %c0_1 = arith.constant 0 : index
    %c0_2 = arith.constant 0 : index
    %1 = vector.load %arg3[%c0_1, %c0_2] : memref<16x32xf32, #tpu.memory_space<vmem>>, vector<16x32xf32>
    %cst = arith.constant dense<0.000000e+00> : vector<8x32xf32>
    %2 = tpu.matmul %0, %1, %cst {dimension_numbers = #tpu.dot_dimension_numbers<[1], [0], [0], [1], [0, 0, 1, 1], [], []>} : vector<8x16xf32>, vector<16x32xf32>, vector<8x32xf32> -> vector<8x32xf32>
    %c0_3 = arith.constant 0 : index
    %c0_4 = arith.constant 0 : index
    %3 = vector.load %arg4[%c0_3, %c0_4] : memref<1x32xf32, #tpu.memory_space<vmem>>, vector<1x32xf32>
    %4 = vector.broadcast %3 : vector<1x32xf32> to vector<8x32xf32>
    %5 = arith.addf %2, %4 : vector<8x32xf32>
    %cst_5 = arith.constant 0.000000e+00 : f32
    %6 = vector.broadcast %cst_5 : f32 to vector<8x32xf32>
    %7 = arith.maximumf %5, %6 : vector<8x32xf32>
    %c0_6 = arith.constant 0 : index
    %c0_7 = arith.constant 0 : index
    %8 = vector.load %arg5[%c0_6, %c0_7] : memref<32x32xf32, #tpu.memory_space<vmem>>, vector<32x32xf32>
    %cst_8 = arith.constant dense<0.000000e+00> : vector<8x32xf32>
    %9 = tpu.matmul %7, %8, %cst_8 {dimension_numbers = #tpu.dot_dimension_numbers<[1], [0], [0], [1], [0, 0, 1, 1], [], []>} : vector<8x32xf32>, vector<32x32xf32>, vector<8x32xf32> -> vector<8x32xf32>
    %c0_9 = arith.constant 0 : index
    %c0_10 = arith.constant 0 : index
    %10 = vector.load %arg2[%c0_9, %c0_10] : memref<8x4xf32, #tpu.memory_space<vmem>>, vector<8x4xf32>
    %c0_11 = arith.constant 0 : index
    %c0_12 = arith.constant 0 : index
    %11 = vector.load %arg6[%c0_11, %c0_12] : memref<4x32xf32, #tpu.memory_space<vmem>>, vector<4x32xf32>
    %12 = vector.extract_strided_slice %10 {offsets = [0, 0], sizes = [8, 1], strides = [1, 1]} : vector<8x4xf32> to vector<8x1xf32>
    %13 = vector.extract_strided_slice %11 {offsets = [0, 0], sizes = [1, 32], strides = [1, 1]} : vector<4x32xf32> to vector<1x32xf32>
    %14 = vector.broadcast %12 : vector<8x1xf32> to vector<8x32xf32>
    %15 = vector.broadcast %13 : vector<1x32xf32> to vector<8x32xf32>
    %16 = arith.mulf %14, %15 : vector<8x32xf32>
    %17 = arith.addf %9, %16 : vector<8x32xf32>
    %18 = vector.extract_strided_slice %10 {offsets = [0, 1], sizes = [8, 1], strides = [1, 1]} : vector<8x4xf32> to vector<8x1xf32>
    %19 = vector.extract_strided_slice %11 {offsets = [1, 0], sizes = [1, 32], strides = [1, 1]} : vector<4x32xf32> to vector<1x32xf32>
    %20 = vector.broadcast %18 : vector<8x1xf32> to vector<8x32xf32>
    %21 = vector.broadcast %19 : vector<1x32xf32> to vector<8x32xf32>
    %22 = arith.mulf %20, %21 : vector<8x32xf32>
    %23 = arith.addf %17, %22 : vector<8x32xf32>
    %24 = vector.extract_strided_slice %10 {offsets = [0, 2], sizes = [8, 1], strides = [1, 1]} : vector<8x4xf32> to vector<8x1xf32>
    %25 = vector.extract_strided_slice %11 {offsets = [2, 0], sizes = [1, 32], strides = [1, 1]} : vector<4x32xf32> to vector<1x32xf32>
    %26 = vector.broadcast %24 : vector<8x1xf32> to vector<8x32xf32>
    %27 = vector.broadcast %25 : vector<1x32xf32> to vector<8x32xf32>
    %28 = arith.mulf %26, %27 : vector<8x32xf32>
    %29 = arith.addf %23, %28 : vector<8x32xf32>
    %30 = vector.extract_strided_slice %10 {offsets = [0, 3], sizes = [8, 1], strides = [1, 1]} : vector<8x4xf32> to vector<8x1xf32>
    %31 = vector.extract_strided_slice %11 {offsets = [3, 0], sizes = [1, 32], strides = [1, 1]} : vector<4x32xf32> to vector<1x32xf32>
    %32 = vector.broadcast %30 : vector<8x1xf32> to vector<8x32xf32>
    %33 = vector.broadcast %31 : vector<1x32xf32> to vector<8x32xf32>
    %34 = arith.mulf %32, %33 : vector<8x32xf32>
    %35 = arith.addf %29, %34 : vector<8x32xf32>
    %c0_13 = arith.constant 0 : index
    %c0_14 = arith.constant 0 : index
    %36 = vector.load %arg7[%c0_13, %c0_14] : memref<1x32xf32, #tpu.memory_space<vmem>>, vector<1x32xf32>
    %37 = vector.broadcast %36 : vector<1x32xf32> to vector<8x32xf32>
    %38 = arith.addf %35, %37 : vector<8x32xf32>
    %cst_15 = arith.constant 0.000000e+00 : f32
    %39 = vector.broadcast %cst_15 : f32 to vector<8x32xf32>
    %40 = arith.maximumf %38, %39 : vector<8x32xf32>
    %c0_16 = arith.constant 0 : index
    %c0_17 = arith.constant 0 : index
    %41 = vector.load %arg8[%c0_16, %c0_17] : memref<1x32xf32, #tpu.memory_space<vmem>>, vector<1x32xf32>
    %42 = vector.broadcast %41 : vector<1x32xf32> to vector<8x32xf32>
    %43 = arith.mulf %40, %42 : vector<8x32xf32>
    %cst_18 = arith.constant dense<0.000000e+00> : vector<8xf32>
    %44 = vector.multi_reduction <add>, %43, %cst_18 [1] : vector<8x32xf32> to vector<8xf32>
    %45 = vector.shape_cast %44 : vector<8xf32> to vector<8x1xf32>
    %c0_19 = arith.constant 0 : index
    %c0_20 = arith.constant 0 : index
    %46 = memref.load %arg9[%c0_19, %c0_20] : memref<1x1xf32, #tpu.memory_space<smem>>
    %47 = vector.broadcast %46 : f32 to vector<8x1xf32>
    %48 = arith.addf %45, %47 : vector<8x1xf32>
    %c0_21 = arith.constant 0 : index
    %c0_22 = arith.constant 0 : index
    %49 = vector.load %arg10[%c0_21, %c0_22] : memref<8x1xf32, #tpu.memory_space<vmem>>, vector<8x1xf32>
    tpu.vector_store %arg10[%c0_21, %c0_22], %48 {strides = array<i32>} : memref<8x1xf32, #tpu.memory_space<vmem>>, vector<8x1xf32>,
    return
  }
  func.func @transform_0(%arg0: i32) -> (i32, i32) {
    %c0_i32 = arith.constant 0 : i32
    %c0_i32_0 = arith.constant 0 : i32
    return %arg0, %c0_i32 : i32, i32
  }
  func.func @transform_1(%arg0: i32) -> (i32, i32) {
    %c0_i32 = arith.constant 0 : i32
    %c0_i32_0 = arith.constant 0 : i32
    return %arg0, %c0_i32 : i32, i32
  }
  func.func @transform_2(%arg0: i32) -> (i32, i32) {
    %c0_i32 = arith.constant 0 : i32
    %c0_i32_0 = arith.constant 0 : i32
    %c0_i32_1 = arith.constant 0 : i32
    return %c0_i32, %c0_i32_0 : i32, i32
  }
  func.func @transform_3(%arg0: i32) -> (i32, i32) {
    %c0_i32 = arith.constant 0 : i32
    %c0_i32_0 = arith.constant 0 : i32
    %c0_i32_1 = arith.constant 0 : i32
    return %c0_i32, %c0_i32_0 : i32, i32
  }
  func.func @transform_4(%arg0: i32) -> (i32, i32) {
    %c0_i32 = arith.constant 0 : i32
    %c0_i32_0 = arith.constant 0 : i32
    %c0_i32_1 = arith.constant 0 : i32
    return %c0_i32, %c0_i32_0 : i32, i32
  }
  func.func @transform_5(%arg0: i32) -> (i32, i32) {
    %c0_i32 = arith.constant 0 : i32
    %c0_i32_0 = arith.constant 0 : i32
    %c0_i32_1 = arith.constant 0 : i32
    return %c0_i32, %c0_i32_0 : i32, i32
  }
  func.func @transform_6(%arg0: i32) -> (i32, i32) {
    %c0_i32 = arith.constant 0 : i32
    %c0_i32_0 = arith.constant 0 : i32
    %c0_i32_1 = arith.constant 0 : i32
    return %c0_i32, %c0_i32_0 : i32, i32
  }
  func.func @transform_7(%arg0: i32) -> (i32, i32) {
    %c0_i32 = arith.constant 0 : i32
    %c0_i32_0 = arith.constant 0 : i32
    %c0_i32_1 = arith.constant 0 : i32
    return %c0_i32, %c0_i32_0 : i32, i32
  }
  func.func @transform_8(%arg0: i32) -> (i32, i32) {
    %c0_i32 = arith.constant 0 : i32
    %c0_i32_0 = arith.constant 0 : i32
    %c0_i32_1 = arith.constant 0 : i32
    return %c0_i32, %c0_i32_0 : i32, i32
  }
  func.func @transform_9(%arg0: i32) -> (i32, i32) {
    %c0_i32 = arith.constant 0 : i32
    %c0_i32_0 = arith.constant 0 : i32
    return %arg0, %c0_i32 : i32, i32
  }
}

</mosaic_0001>

<llo_original>
// kernel: tpu_custom_call.1
$region0: #{tpu_custom_call.1}
  #allocation0 [shape = 'u32[]', space=smem, size = 0x4, offset = 0x4, fixed_abs, tag = 'smem constant byte address 0x4 - core index']
  #allocation1 [shape = 'u32[144,128]{1,0:T(1,128)}', space=vmem, size = 0x12000, scoped, tag = 'internal scratch']
  #allocation2 [shape = 'f32[1,1]{1,0:T(1,128)S(6)}', space=smem, size = 0x200, scoped, tag = 'scoped memory for tpu_custom_call.1']
  %s0 = inlined_call_operand.hbm [shape: f32[8,16], index: 0, kind: input, shape index: {}]
  %s1 = inlined_call_operand.vmem [shape: f32[8,4], index: 1, kind: input, shape index: {}]
  %s2 = inlined_call_operand.vmem [shape: f32[16,32], index: 2, kind: input, shape index: {}]
  %s3 = inlined_call_operand.vmem [shape: f32[1,32], index: 3, kind: input, shape index: {}]
  %s4 = inlined_call_operand.hbm [shape: f32[32,32], index: 4, kind: input, shape index: {}]
  %s5 = inlined_call_operand.vmem [shape: f32[4,32], index: 5, kind: input, shape index: {}]
  %s6 = inlined_call_operand.vmem [shape: f32[1,32], index: 6, kind: input, shape index: {}]
  %s7 = inlined_call_operand.vmem [shape: f32[1,32], index: 7, kind: input, shape index: {}]
  %s8 = inlined_call_operand.<no memory space> [shape: f32[1,1], index: 8, kind: input, shape index: {}]
  %s9 = inlined_call_operand.vmem [shape: f32[8,1], index: 9, kind: output, shape index: {}]
  %s10 = sld [smem:[#allocation0]]
  $region54: #{tpu_custom_call.1} parent=0
    _
  %s12 = ssub.s32 1, %s10
  %s13 = scalar_select 0, %s12, %s10
  %14 = sst [smem:[#allocation2]] %s8
  $region1: #{tpu_custom_call.1} parent=0
    #allocation3 [shape = 'u8[4096]{0}', space=vmem, size = 0x1000, scoped, tag = 'input window, operand 0, single buffered']
    #allocation4 [shape = 's32[1]{0}', space=sflag, size = 0x4, scoped, tag = 'scoped memory for tpu_custom_call.1']
    #allocation5 [shape = 'u8[16384]{0}', space=vmem, size = 0x4000, scoped, tag = 'input window, operand 4, single buffered']
    #allocation6 [shape = 's32[1]{0}', space=sflag, size = 0x4, scoped, tag = 'scoped memory for tpu_custom_call.1']
    %15 = vsyncpa [#allocation4], 0
    %16 = vsyncpa [#allocation6], 0
    // Predicated region
    $region2: #{tpu_custom_call.1} parent=1 // pred_check
      _
    $region3: #{tpu_custom_call.1} parent=1 // pred_check_branch
      %18 = sbr.rel (0) target = $region5
    $region4: #{tpu_custom_call.1} parent=1 // pred_region
      %s20 = ssub.s32 128, 128
      %21 = vsyncadd [#allocation4], %s20
      %s23 = sshll.u32 [#allocation3], 4
      %s24 = int_to_ptr.vmem [resolvable:$true] %s23
      %26 = dma.hbm_to_vmem [thread:$0]  %s0, 128, %s24, [#allocation4]
    $region5: #{tpu_custom_call.1} parent=1 // pred_fallthru
      _
    // Predicated region
    $region6: #{tpu_custom_call.1} parent=1 // pred_check
      _
    $region7: #{tpu_custom_call.1} parent=1 // pred_check_branch
      %28 = sbr.rel (0) target = $region9
    $region8: #{tpu_custom_call.1} parent=1 // pred_region
      _
    $region9: #{tpu_custom_call.1} parent=1 // pred_fallthru
      _
    // Predicated region
    $region10: #{tpu_custom_call.1} parent=1 // pred_check
      _
    $region11: #{tpu_custom_call.1} parent=1 // pred_check_branch
      %30 = sbr.rel (0) target = $region13
    $region12: #{tpu_custom_call.1} parent=1 // pred_region
      _
    $region13: #{tpu_custom_call.1} parent=1 // pred_fallthru
      _
    // Predicated region
    $region14: #{tpu_custom_call.1} parent=1 // pred_check
      _
    $region15: #{tpu_custom_call.1} parent=1 // pred_check_branch
      %32 = sbr.rel (0) target = $region17
    $region16: #{tpu_custom_call.1} parent=1 // pred_region
      _
    $region17: #{tpu_custom_call.1} parent=1 // pred_fallthru
      _
    // Predicated region
    $region18: #{tpu_custom_call.1} parent=1 // pred_check
      _
    $region19: #{tpu_custom_call.1} parent=1 // pred_check_branch
      %34 = sbr.rel (0) target = $region21
    $region20: #{tpu_custom_call.1} parent=1 // pred_region
      %s36 = ssub.s32 512, 512
      %37 = vsyncadd [#allocation6], %s36
      %s38 = sshll.u32 [#allocation5], 4
      %s39 = int_to_ptr.vmem [resolvable:$true] %s38
      %44 = dma.hbm_to_vmem [thread:$0]  %s4, 512, %s39, [#allocation6], 128, 128, 8
    $region21: #{tpu_custom_call.1} parent=1 // pred_fallthru
      _
    // Predicated region
    $region22: #{tpu_custom_call.1} parent=1 // pred_check
      _
    $region23: #{tpu_custom_call.1} parent=1 // pred_check_branch
      %46 = sbr.rel (0) target = $region25
    $region24: #{tpu_custom_call.1} parent=1 // pred_region
      _
    $region25: #{tpu_custom_call.1} parent=1 // pred_fallthru
      _
    // Predicated region
    $region26: #{tpu_custom_call.1} parent=1 // pred_check
      _
    $region27: #{tpu_custom_call.1} parent=1 // pred_check_branch
      %48 = sbr.rel (0) target = $region29
    $region28: #{tpu_custom_call.1} parent=1 // pred_region
      _
    $region29: #{tpu_custom_call.1} parent=1 // pred_fallthru
      _
    // Predicated region
    $region30: #{tpu_custom_call.1} parent=1 // pred_check
      _
    $region31: #{tpu_custom_call.1} parent=1 // pred_check_branch
      %50 = sbr.rel (0) target = $region33
    $region32: #{tpu_custom_call.1} parent=1 // pred_region
      _
    $region33: #{tpu_custom_call.1} parent=1 // pred_fallthru
      _
    // Predicated region
    $region34: #{tpu_custom_call.1} parent=1 // pred_check
      _
    $region35: #{tpu_custom_call.1} parent=1 // pred_check_branch
      %52 = sbr.rel (0) target = $region37
    $region36: #{tpu_custom_call.1} parent=1 // pred_region
      _
    $region37: #{tpu_custom_call.1} parent=1 // pred_fallthru
      _
    // Predicated region
    $region38: #{tpu_custom_call.1} parent=1 // pred_check
      _
    $region39: #{tpu_custom_call.1} parent=1 // pred_check_branch
      %54 = sbr.rel (0) target = $region41
    $region40: #{tpu_custom_call.1} parent=1 // pred_region
      %55 = dma.done [#allocation4], 128
    $region41: #{tpu_custom_call.1} parent=1 // pred_fallthru
      _
    // Predicated region
    $region42: #{tpu_custom_call.1} parent=1 // pred_check
      _
    $region43: #{tpu_custom_call.1} parent=1 // pred_check_branch
      %57 = sbr.rel (0) target = $region45
    $region44: #{tpu_custom_call.1} parent=1 // pred_region
      %58 = dma.done [#allocation6], 512
    $region45: #{tpu_custom_call.1} parent=1 // pred_fallthru
      _
    %v59 = vld [vmem:[#allocation3] sm:$0xff]
    %v60 = vld [vmem:[%s2] sm:$0xff]
    %v61 = vld [vmem:[%s2 + $0x8] sm:$0xff]
    %v62 = vld [vmem:[%s3] sm:$0x1]
    %v64 = vlaneseq
    %v65 = vshrl.u32 %v64, 7
    %v66 = vsub.s32 0, %v65
    %v67 = vrot.slane %v62, %v66
    %vm69 = vcmask 130048
    %v71 = vsel %vm69, %v59, 0
    %73 = vmatprep.subr.mxu0 0.0
    %74 = vmatpush1.msra.mxu0 %v60
    %75 = vmatprep.subr.mxu0 0.0
    %76 = vmatpush1.msra.mxu0 %v61
    %77 = vmatprep.subr.mxu0 0.0
    %78 = vmatpush1.msra.mxu0 0.0
    %79 = vmatprep.subr.mxu0 0.0
    %80 = vmatpush1.msra.mxu0 0.0
    %81 = vmatprep.subr.mxu0 0.0
    %82 = vmatpush1.msra.mxu0 0.0
    %83 = vmatprep.subr.mxu0 0.0
    %84 = vmatpush1.msra.mxu0 0.0
    %85 = vmatprep.subr.mxu0 0.0
    %86 = vmatpush1.msra.mxu0 0.0
    %87 = vmatprep.subr.mxu0 0.0
    %88 = vmatpush1.msra.mxu0 0.0
    %89 = vmatprep.subr.mxu0 0.0
    %90 = vmatpush1.msra.mxu0 0.0
    %91 = vmatprep.subr.mxu0 0.0
    %92 = vmatpush1.msra.mxu0 0.0
    %93 = vmatprep.subr.mxu0 0.0
    %94 = vmatpush1.msra.mxu0 0.0
    %95 = vmatprep.subr.mxu0 0.0
    %96 = vmatpush1.msra.mxu0 0.0
    %97 = vmatprep.subr.mxu0 0.0
    %98 = vmatpush1.msra.mxu0 0.0
    %99 = vmatprep.subr.mxu0 0.0
    %100 = vmatpush1.msra.mxu0 0.0
    %101 = vmatprep.subr.mxu0 0.0
    %102 = vmatpush1.msra.mxu0 0.0
    %103 = vmatprep.subr.mxu0 0.0
    %104 = vmatpush1.msra.mxu0 0.0
    %105 = vmatprep.subr.mxu0 0.0
    %106 = vmatpush1.msra.mxu0 0.0
    %107 = vmatprep.subr.mxu0 0.0
    %108 = vmatpush1.msra.mxu0 0.0
    %109 = vmatprep.subr.mxu0 0.0
    %110 = vmatpush1.msra.mxu0 0.0
    %111 = vmatprep.subr.mxu0 0.0
    %112 = vmatpush1.msra.mxu0 0.0
    %113 = vmatprep.subr.mxu0 0.0
    %114 = vmatpush1.msra.mxu0 0.0
    %115 = vmatprep.subr.mxu0 0.0
    %116 = vmatpush1.msra.mxu0 0.0
    %117 = vmatprep.subr.mxu0 0.0
    %118 = vmatpush1.msra.mxu0 0.0
    %119 = vmatprep.subr.mxu0 0.0
    %120 = vmatpush1.msra.mxu0 0.0
    %121 = vmatprep.subr.mxu0 0.0
    %122 = vmatpush1.msra.mxu0 0.0
    %123 = vmatprep.subr.mxu0 0.0
    %124 = vmatpush1.msra.mxu0 0.0
    %125 = vmatprep.subr.mxu0 0.0
    %126 = vmatpush1.msra.mxu0 0.0
    %127 = vmatprep.subr.mxu0 0.0
    %128 = vmatpush1.msra.mxu0 0.0
    %129 = vmatprep.subr.mxu0 0.0
    %130 = vmatpush1.msra.mxu0 0.0
    %131 = vmatprep.subr.mxu0 0.0
    %132 = vmatpush1.msra.mxu0 0.0
    %133 = vmatprep.subr.mxu0 0.0
    %134 = vmatpush1.msra.mxu0 0.0
    %135 = vmatprep.subr.mxu0 0.0
    %136 = vmatpush1.msra.mxu0 0.0
    %137 = vmatprep.mubr.f32.mxu0 0.0
    %138 = vmatmul.mubr.f32.gmra.mrb[0].mxu0 %v71
    %v139 = vpop.f32.mrb[0].mxu0
    %v140 = vadd.f32 %v67, %v139
    %v141 = vpop.f32.mrb[0].mxu0
    %142 = vdwg.mxu0
    %v143 = vmax.f32 %v140, 0.0
    %v144 = vld [vmem:[#allocation5] sm:$0xff]
    %v145 = vld [vmem:[#allocation5 + $0x8] sm:$0xff]
    %v146 = vld [vmem:[#allocation5 + $0x10] sm:$0xff]
    %v147 = vld [vmem:[#allocation5 + $0x18] sm:$0xff]
    %v148 = vld [vmem:[%s1] sm:$0xff]
    %v149 = vld [vmem:[%s5] sm:$0xf]
    %151 = vset.pattern.permute.xlu0 0
    %152 = vperm.xlu0 %151, %v148
    %v153 = vpop.permute.xlu0 %152
    %v155 = vlaneseq
    %v156 = vshrl.u32 %v155, 7
    %v157 = vsub.s32 0, %v156
    %v158 = vrot.slane %v149, %v157
    %v159 = vmul.f32 %v153, %v158
    %vm160 = vcmask 261120
    %v162 = vsel %vm160, %v143, 0
    %164 = vmatprep.subr.mxu0 0.0
    %165 = vmatpush1.msra.mxu0 %v144
    %166 = vmatprep.subr.mxu0 0.0
    %167 = vmatpush1.msra.mxu0 %v145
    %168 = vmatprep.subr.mxu0 0.0
    %169 = vmatpush1.msra.mxu0 %v146
    %170 = vmatprep.subr.mxu0 0.0
    %171 = vmatpush1.msra.mxu0 %v147
    %172 = vmatprep.subr.mxu0 0.0
    %173 = vmatpush1.msra.mxu0 0.0
    %174 = vmatprep.subr.mxu0 0.0
    %175 = vmatpush1.msra.mxu0 0.0
    %176 = vmatprep.subr.mxu0 0.0
    %177 = vmatpush1.msra.mxu0 0.0
    %178 = vmatprep.subr.mxu0 0.0
    %179 = vmatpush1.msra.mxu0 0.0
    %180 = vmatprep.subr.mxu0 0.0
    %181 = vmatpush1.msra.mxu0 0.0
    %182 = vmatprep.subr.mxu0 0.0
    %183 = vmatpush1.msra.mxu0 0.0
    %184 = vmatprep.subr.mxu0 0.0
    %185 = vmatpush1.msra.mxu0 0.0
    %186 = vmatprep.subr.mxu0 0.0
    %187 = vmatpush1.msra.mxu0 0.0
    %188 = vmatprep.subr.mxu0 0.0
    %189 = vmatpush1.msra.mxu0 0.0
    %190 = vmatprep.subr.mxu0 0.0
    %191 = vmatpush1.msra.mxu0 0.0
    %192 = vmatprep.subr.mxu0 0.0
    %193 = vmatpush1.msra.mxu0 0.0
    %194 = vmatprep.subr.mxu0 0.0
    %195 = vmatpush1.msra.mxu0 0.0
    %196 = vmatprep.subr.mxu0 0.0
    %197 = vmatpush1.msra.mxu0 0.0
    %198 = vmatprep.subr.mxu0 0.0
    %199 = vmatpush1.msra.mxu0 0.0
    %200 = vmatprep.subr.mxu0 0.0
    %201 = vmatpush1.msra.mxu0 0.0
    %202 = vmatprep.subr.mxu0 0.0
    %203 = vmatpush1.msra.mxu0 0.0
    %204 = vmatprep.subr.mxu0 0.0
    %205 = vmatpush1.msra.mxu0 0.0
    %206 = vmatprep.subr.mxu0 0.0
    %207 = vmatpush1.msra.mxu0 0.0
    %208 = vmatprep.subr.mxu0 0.0
    %209 = vmatpush1.msra.mxu0 0.0
    %210 = vmatprep.subr.mxu0 0.0
    %211 = vmatpush1.msra.mxu0 0.0
    %212 = vmatprep.subr.mxu0 0.0
    %213 = vmatpush1.msra.mxu0 0.0
    %214 = vmatprep.subr.mxu0 0.0
    %215 = vmatpush1.msra.mxu0 0.0
    %216 = vmatprep.subr.mxu0 0.0
    %217 = vmatpush1.msra.mxu0 0.0
    %218 = vmatprep.subr.mxu0 0.0
    %219 = vmatpush1.msra.mxu0 0.0
    %220 = vmatprep.subr.mxu0 0.0
    %221 = vmatpush1.msra.mxu0 0.0
    %222 = vmatprep.subr.mxu0 0.0
    %223 = vmatpush1.msra.mxu0 0.0
    %224 = vmatprep.subr.mxu0 0.0
    %225 = vmatpush1.msra.mxu0 0.0
    %226 = vmatprep.subr.mxu0 0.0
    %227 = vmatpush1.msra.mxu0 0.0
    %228 = vmatprep.mubr.f32.mxu0 0.0
    %229 = vmatmul.mubr.f32.gmra.mrb[0].mxu0 %v162
    %v230 = vpop.f32.mrb[0].mxu0
    %v231 = vadd.f32 %v159, %v230
    %v232 = vpop.f32.mrb[0].mxu0
    %233 = vdwg.mxu0
    %234 = vset.pattern.permute.xlu0 1
    %235 = vperm.xlu0 %234, %v148
    %v236 = vpop.permute.xlu0 %235
    %v238 = vlaneseq
    %v239 = vshrl.u32 %v238, 7
    %v240 = vsub.s32 1, %v239
    %v241 = vrot.slane %v149, %v240
    %v242 = vmul.f32 %v236, %v241
    %v243 = vadd.f32 %v231, %v242
    %244 = vset.pattern.permute.xlu0 2
    %245 = vperm.xlu0 %244, %v148
    %v246 = vpop.permute.xlu0 %245
    %v248 = vlaneseq
    %v249 = vshrl.u32 %v248, 7
    %v250 = vsub.s32 2, %v249
    %v251 = vrot.slane %v149, %v250
    %v252 = vmul.f32 %v246, %v251
    %v253 = vadd.f32 %v243, %v252
    %254 = vset.pattern.permute.xlu0 3
    %255 = vperm.xlu0 %254, %v148
    %v256 = vpop.permute.xlu0 %255
    %v258 = vlaneseq
    %v259 = vshrl.u32 %v258, 7
    %v260 = vsub.s32 3, %v259
    %v261 = vrot.slane %v149, %v260
    %v262 = vmul.f32 %v256, %v261
    %v263 = vadd.f32 %v253, %v262
    %v264 = vld [vmem:[%s6] sm:$0x1]
    %v266 = vlaneseq
    %v267 = vshrl.u32 %v266, 7
    %v268 = vsub.s32 0, %v267
    %v269 = vrot.slane %v264, %v268
    %v271 = vadd.f32 %v263, %v269
    %v272 = vmax.f32 %v271, 0.0
    %v273 = vld [vmem:[%s7] sm:$0x1]
    %v275 = vlaneseq
    %v276 = vshrl.u32 %v275, 7
    %v277 = vsub.s32 0, %v276
    %v278 = vrot.slane %v273, %v277
    %v280 = vmul.f32 %v272, %v278
    %v281 = vsel %vm160, %v280, 0.0
    %282 = vadd.xlane.f32.xlu0 %v281
    %v283 = vpop.xlane.xlu0 %282
    %s284 = sld [smem:[#allocation2]]
    %v285 = vstv %s284
    %v286 = vadd.f32 %v283, %v285
    %vm287 = vcmask 7168
    %288 = vst.msk [vmem:[%s9] sm:$0xff] %vm287, %v286
    // Predicated region
    $region46: #{tpu_custom_call.1} parent=1 // pred_check
      _
    $region47: #{tpu_custom_call.1} parent=1 // pred_check_branch
      %290 = sbr.rel (0) target = $region49
    $region48: #{tpu_custom_call.1} parent=1 // pred_region
      _
    $region49: #{tpu_custom_call.1} parent=1 // pred_fallthru
      _
    // Predicated region
    $region50: #{tpu_custom_call.1} parent=1 // pred_check
      _
    $region51: #{tpu_custom_call.1} parent=1 // pred_check_branch
      %292 = sbr.rel (0) target = $region53
    $region52: #{tpu_custom_call.1} parent=1 // pred_region
      _
    $region53: #{tpu_custom_call.1} parent=1 // pred_fallthru
      _
    %293 = vsyncpa [#allocation4], 1
    %294 = vsyncpa [#allocation6], 1

</llo_original>
